<compile_context>
chip_gen: v7x
topology: tpu7x:2x2x1
jax: 0.10.0
libtpu: 0.0.40
codegen_flags: <defaults>
</compile_context>

<pallas_src>
import functools

import jax
import jax.numpy as jnp
from jax.experimental import pallas as pl
from jax.experimental.pallas import tpu as pltpu


def _jaccard_sums_kernel(logits_ref, target_ref, inter_ref, card_ref, *,
                         hw, tile_hw):
    # logits_ref: (C, T) input dtype, target_ref: (1, T) int32
    # inter_ref, card_ref: (1, 1, C) float32, resident across the pixel axis.
    j = pl.program_id(1)

    @pl.when(j == 0)
    def _():
        inter_ref[...] = jnp.zeros_like(inter_ref)
        card_ref[...] = jnp.zeros_like(card_ref)

    x = logits_ref[...].astype(jnp.float32)                # (C, T) compute in f32
    c, t = x.shape
    labels = target_ref[...]                               # (1, T) int32

    # Tail-tile masking (static Python branch: only emitted if hw % tile != 0).
    if hw % tile_hw != 0:
        lane = jax.lax.broadcasted_iota(jnp.int32, (1, t), 1)
        valid = lane < (hw - j * tile_hw)                  # (1, T) bool
        x = jnp.where(valid, x, 0.0)
    else:
        valid = None

    # Softmax over the class (sublane) axis.
    m = jnp.max(x, axis=0, keepdims=True)                  # (1, T)
    e = jnp.exp(x - m)                                     # (C, T)  EUP
    s = jnp.sum(e, axis=0, keepdims=True)                  # (1, T)
    inv = 1.0 / s                                          # exact; only T divides
    p = e * inv                                            # (C, T)

    # One-hot via lane-dense label compare against class ids on sublanes.
    class_ids = jax.lax.broadcasted_iota(jnp.int32, (c, t), 0)
    one_hot_b = labels == class_ids                        # (C, T) bool
    if valid is not None:
        one_hot_b = jnp.logical_and(one_hot_b, valid)
        p = jnp.where(valid, p, 0.0)
    one_hot = one_hot_b.astype(jnp.float32)

    # Per-class partial sums over the pixels (lane axis) of this tile.
    inter = jnp.sum(p * one_hot, axis=1)                   # (C,)
    card = jnp.sum(p + one_hot, axis=1)                    # (C,)
    inter_ref[...] += inter.reshape(1, 1, c)
    card_ref[...] += card.reshape(1, 1, c)


def jaccard_loss(logits, target, eps=1e-07, tile_hw=2048):
    """logits: (N, C, H, W) float; target: (N, 1, H, W) int labels."""
    n, c, h, w = logits.shape
    hw = h * w

    # Channels-major, no transpose: plain reshapes only.
    logits_r = logits.reshape(n, c, hw)
    target_r = target.reshape(n, 1, hw).astype(jnp.int32)

    # Pick the pixel tile: full hw if it fits, else largest multiple of 128.
    if hw <= tile_hw:
        tile = hw
    else:
        tile = max(128, (min(tile_hw, hw) // 128) * 128)
    n_tiles = pl.cdiv(hw, tile)

    kernel = functools.partial(_jaccard_sums_kernel, hw=hw, tile_hw=tile)

    inter, card = pl.pallas_call(
        kernel,
        out_shape=(
            jax.ShapeDtypeStruct((n, 1, c), jnp.float32),
            jax.ShapeDtypeStruct((n, 1, c), jnp.float32),
        ),
        grid_spec=pltpu.PrefetchScalarGridSpec(
            num_scalar_prefetch=0,
            grid=(n, n_tiles),
            in_specs=[
                pl.BlockSpec((pl.Squeezed(), c, tile), lambda b, j: (b, 0, j)),
                pl.BlockSpec((pl.Squeezed(), 1, tile), lambda b, j: (b, 0, j)),
            ],
            out_specs=[
                pl.BlockSpec((1, 1, c), lambda b, j: (b, 0, 0)),
                pl.BlockSpec((1, 1, c), lambda b, j: (b, 0, 0)),
            ],
        ),
        compiler_params=pltpu.CompilerParams(
            dimension_semantics=("parallel", "arbitrary"),
        ),
    )(logits_r, target_r)

    # Tiny epilogue in plain JAX: combine per-batch partials, divide, mean.
    intersection = jnp.sum(inter[:, 0, :], axis=0)          # (C,)
    cardinality = jnp.sum(card[:, 0, :], axis=0)            # (C,)
    union = cardinality - intersection
    jaccard = jnp.mean(intersection / (union + eps))
    return (1.0 - jaccard).astype(logits.dtype)


def jaccard_loss_ref(logits, target, eps=1e-07):
    """Pure-JAX reference matching the PyTorch module semantics."""
    c = logits.shape[1]
    one_hot = jax.nn.one_hot(target[:, 0], c, dtype=jnp.float32)    # (N,H,W,C)
    one_hot = jnp.transpose(one_hot, (0, 3, 1, 2))                  # (N,C,H,W)
    probas = jax.nn.softmax(logits.astype(jnp.float32), axis=1)
    dims = (0, 2, 3)
    intersection = jnp.sum(probas * one_hot, axis=dims)
    cardinality = jnp.sum(probas + one_hot, axis=dims)
    union = cardinality - intersection
    return (1.0 - jnp.mean(intersection / (union + eps))).astype(logits.dtype)


if __name__ == "__main__":
    key = jax.random.PRNGKey(0)
    k1, k2 = jax.random.split(key)

    N, C, H, W = 2, 4, 16, 16
    logits = jax.random.normal(k1, (N, C, H, W), dtype=jnp.float32)
    target = jax.random.randint(k2, (N, 1, H, W), 0, C, dtype=jnp.int32)

    loss = jaccard_loss(logits, target)
    loss = jax.block_until_ready(loss)

    ref = jax.block_until_ready(jaccard_loss_ref(logits, target))
    assert jnp.allclose(loss, ref, atol=1e-5, rtol=1e-5), (loss, ref)

    # Also exercise a ragged-tail shape (hw not a multiple of the tile).
    H2, W2 = 48, 50   # hw = 2400 -> tile 2048 + masked tail of 352
    logits2 = jax.random.normal(k1, (N, C, H2, W2), dtype=jnp.float32)
    target2 = jax.random.randint(k2, (N, 1, H2, W2), 0, C, dtype=jnp.int32)
    loss2 = jax.block_until_ready(jaccard_loss(logits2, target2))
    ref2 = jax.block_until_ready(jaccard_loss_ref(logits2, target2))
    assert jnp.allclose(loss2, ref2, atol=1e-5, rtol=1e-5), (loss2, ref2)

    print("KERNEL_OK")
</pallas_src>

<mosaic_0001>
module attributes {stable_mosaic.version = 11 : i64} {
  func.func @_jaccard_sums_kernel(%arg0: i32, %arg1: i32, %arg2: memref<1x4x256xf32, #tpu.memory_space<vmem>>, %arg3: memref<1x1x256xi32, #tpu.memory_space<vmem>>, %arg4: memref<1x1x4xf32, #tpu.memory_space<vmem>>, %arg5: memref<1x1x4xf32, #tpu.memory_space<vmem>>) attributes {dimension_semantics = [#tpu.dimension_semantics<parallel>, #tpu.dimension_semantics<arbitrary>], iteration_bounds = array<i64: 2, 1>, scalar_prefetch = 0 : i64, scratch_operands = 0 : i64, tpu.core_type = #tpu.core_type<tc>, window_params = [{transform_indices = @transform_0, window_bounds = array<i64: 1, 4, 256>}, {transform_indices = @transform_1, window_bounds = array<i64: 1, 1, 256>}, {transform_indices = @transform_2, window_bounds = array<i64: 1, 1, 4>}, {transform_indices = @transform_3, window_bounds = array<i64: 1, 1, 4>}]} {
    %c0_i32 = arith.constant 0 : i32
    %0 = arith.cmpi eq, %arg1, %c0_i32 : i32
    %1 = arith.extui %0 : i1 to i32
    %c0_i32_0 = arith.constant 0 : i32
    %2 = arith.cmpi ne, %1, %c0_i32_0 : i32
    scf.if %2 {
      %cst_22 = arith.constant 0.000000e+00 : f32
      %35 = vector.broadcast %cst_22 : f32 to vector<1x1x4xf32>
      %c0_23 = arith.constant 0 : index
      %c0_24 = arith.constant 0 : index
      %c0_25 = arith.constant 0 : index
      %36 = vector.load %arg4[%c0_23, %c0_24, %c0_25] : memref<1x1x4xf32, #tpu.memory_space<vmem>>, vector<1x1x4xf32>
      tpu.vector_store %arg4[%c0_23, %c0_24, %c0_25], %35 {strides = array<i32>} : memref<1x1x4xf32, #tpu.memory_space<vmem>>, vector<1x1x4xf32>,
      %cst_26 = arith.constant 0.000000e+00 : f32
      %37 = vector.broadcast %cst_26 : f32 to vector<1x1x4xf32>
      %c0_27 = arith.constant 0 : index
      %c0_28 = arith.constant 0 : index
      %c0_29 = arith.constant 0 : index
      %38 = vector.load %arg5[%c0_27, %c0_28, %c0_29] : memref<1x1x4xf32, #tpu.memory_space<vmem>>, vector<1x1x4xf32>
      tpu.vector_store %arg5[%c0_27, %c0_28, %c0_29], %37 {strides = array<i32>} : memref<1x1x4xf32, #tpu.memory_space<vmem>>, vector<1x1x4xf32>,
    } else {
    }
    %c0 = arith.constant 0 : index
    %c0_1 = arith.constant 0 : index
    %c0_2 = arith.constant 0 : index
    %3 = vector.load %arg2[%c0, %c0_1, %c0_2] : memref<1x4x256xf32, #tpu.memory_space<vmem>>, vector<1x4x256xf32>
    %4 = vector.shape_cast %3 : vector<1x4x256xf32> to vector<4x256xf32>
    %c0_3 = arith.constant 0 : index
    %c0_4 = arith.constant 0 : index
    %c0_5 = arith.constant 0 : index
    %5 = vector.load %arg3[%c0_3, %c0_4, %c0_5] : memref<1x1x256xi32, #tpu.memory_space<vmem>>, vector<1x1x256xi32>
    %6 = vector.shape_cast %5 : vector<1x1x256xi32> to vector<1x256xi32>
    %cst = arith.constant dense<0xFF800000> : vector<256xf32>
    %7 = vector.multi_reduction <maximumf>, %4, %cst [0] : vector<4x256xf32> to vector<256xf32>
    %8 = vector.shape_cast %7 : vector<256xf32> to vector<1x256xf32>
    %9 = vector.broadcast %8 : vector<1x256xf32> to vector<4x256xf32>
    %10 = arith.subf %4, %9 : vector<4x256xf32>
    %11 = math.exp %10 : vector<4x256xf32>
    %cst_6 = arith.constant dense<0.000000e+00> : vector<256xf32>
    %12 = vector.multi_reduction <add>, %11, %cst_6 [0] : vector<4x256xf32> to vector<256xf32>
    %13 = vector.shape_cast %12 : vector<256xf32> to vector<1x256xf32>
    %cst_7 = arith.constant 1.000000e+00 : f32
    %14 = vector.broadcast %cst_7 : f32 to vector<1x256xf32>
    %15 = arith.divf %14, %13 : vector<1x256xf32>
    %16 = vector.broadcast %15 : vector<1x256xf32> to vector<4x256xf32>
    %17 = arith.mulf %11, %16 : vector<4x256xf32>
    %18 = tpu.iota {dimensions = array<i32: 0>} : vector<4x256xi32>
    %19 = vector.broadcast %6 : vector<1x256xi32> to vector<4x256xi32>
    %20 = arith.cmpi eq, %19, %18 : vector<4x256xi32>
    %21 = arith.extui %20 : vector<4x256xi1> to vector<4x256xi32>
    %22 = arith.sitofp %21 : vector<4x256xi32> to vector<4x256xf32>
    %23 = arith.mulf %17, %22 : vector<4x256xf32>
    %cst_8 = arith.constant dense<0.000000e+00> : vector<4xf32>
    %24 = vector.multi_reduction <add>, %23, %cst_8 [1] : vector<4x256xf32> to vector<4xf32>
    %25 = arith.addf %17, %22 : vector<4x256xf32>
    %cst_9 = arith.constant dense<0.000000e+00> : vector<4xf32>
    %26 = vector.multi_reduction <add>, %25, %cst_9 [1] : vector<4x256xf32> to vector<4xf32>
    %c0_10 = arith.constant 0 : index
    %c0_11 = arith.constant 0 : index
    %c0_12 = arith.constant 0 : index
    %27 = vector.load %arg4[%c0_10, %c0_11, %c0_12] : memref<1x1x4xf32, #tpu.memory_space<vmem>>, vector<1x1x4xf32>
    %28 = vector.shape_cast %24 : vector<4xf32> to vector<1x1x4xf32>
    %29 = arith.addf %27, %28 : vector<1x1x4xf32>
    %c0_13 = arith.constant 0 : index
    %c0_14 = arith.constant 0 : index
    %c0_15 = arith.constant 0 : index
    %30 = vector.load %arg4[%c0_13, %c0_14, %c0_15] : memref<1x1x4xf32, #tpu.memory_space<vmem>>, vector<1x1x4xf32>
    tpu.vector_store %arg4[%c0_13, %c0_14, %c0_15], %29 {strides = array<i32>} : memref<1x1x4xf32, #tpu.memory_space<vmem>>, vector<1x1x4xf32>,
    %c0_16 = arith.constant 0 : index
    %c0_17 = arith.constant 0 : index
    %c0_18 = arith.constant 0 : index
    %31 = vector.load %arg5[%c0_16, %c0_17, %c0_18] : memref<1x1x4xf32, #tpu.memory_space<vmem>>, vector<1x1x4xf32>
    %32 = vector.shape_cast %26 : vector<4xf32> to vector<1x1x4xf32>
    %33 = arith.addf %31, %32 : vector<1x1x4xf32>
    %c0_19 = arith.constant 0 : index
    %c0_20 = arith.constant 0 : index
    %c0_21 = arith.constant 0 : index
    %34 = vector.load %arg5[%c0_19, %c0_20, %c0_21] : memref<1x1x4xf32, #tpu.memory_space<vmem>>, vector<1x1x4xf32>
    tpu.vector_store %arg5[%c0_19, %c0_20, %c0_21], %33 {strides = array<i32>} : memref<1x1x4xf32, #tpu.memory_space<vmem>>, vector<1x1x4xf32>,
    return
  }
  func.func @transform_0(%arg0: i32, %arg1: i32) -> (i32, i32, i32) {
    %c0_i32 = arith.constant 0 : i32
    %c0_i32_0 = arith.constant 0 : i32
    return %arg0, %c0_i32, %arg1 : i32, i32, i32
  }
  func.func @transform_1(%arg0: i32, %arg1: i32) -> (i32, i32, i32) {
    %c0_i32 = arith.constant 0 : i32
    %c0_i32_0 = arith.constant 0 : i32
    return %arg0, %c0_i32, %arg1 : i32, i32, i32
  }
  func.func @transform_2(%arg0: i32, %arg1: i32) -> (i32, i32, i32) {
    %c0_i32 = arith.constant 0 : i32
    %c0_i32_0 = arith.constant 0 : i32
    %c0_i32_1 = arith.constant 0 : i32
    return %arg0, %c0_i32, %c0_i32_0 : i32, i32, i32
  }
  func.func @transform_3(%arg0: i32, %arg1: i32) -> (i32, i32, i32) {
    %c0_i32 = arith.constant 0 : i32
    %c0_i32_0 = arith.constant 0 : i32
    %c0_i32_1 = arith.constant 0 : i32
    return %arg0, %c0_i32, %c0_i32_0 : i32, i32, i32
  }
}

</mosaic_0001>

<llo_original>
// kernel: tpu_custom_call.1
$region0: #{tpu_custom_call.1}
  #allocation0 [shape = 'u32[]', space=smem, size = 0x4, offset = 0x4, fixed_abs, tag = 'smem constant byte address 0x4 - core index']
  #allocation1 [shape = 'u32[144,128]{1,0:T(1,128)}', space=vmem, size = 0x12000, scoped, tag = 'internal scratch']
  %s0 = inlined_call_operand.hbm [shape: f32[2,4,256], index: 0, kind: input, shape index: {}]
  %s1 = inlined_call_operand.hbm [shape: s32[2,1,256], index: 1, kind: input, shape index: {}]
  %s2 = inlined_call_operand.hbm [shape: f32[2,1,4], index: 2, kind: output, shape index: {0}]
  %s3 = inlined_call_operand.hbm [shape: f32[2,1,4], index: 3, kind: output, shape index: {1}]
  %4 = xla_tuple %s2, %s3
  %s5 = sld [smem:[#allocation0]]
  $region61: #{tpu_custom_call.1} parent=0
    _
  %s7 = ssub.s32 1, %s5
  %s8 = scalar_select 0, %s7, %s5
  $region1: #{tpu_custom_call.1} parent=0
    #allocation2 [shape = 'u8[8192]{0}', space=vmem, size = 0x2000, scoped, tag = 'input window, operand 0']
    #allocation3 [shape = 's32[2]{0}', space=sflag, size = 0x8, scoped, tag = 'scoped memory for tpu_custom_call.1']
    #allocation4 [shape = 's32[2]{0}', space=sflag, size = 0x8, scoped, tag = 'scoped memory for tpu_custom_call.1']
    #allocation5 [shape = 'u8[2048]{0}', space=vmem, size = 0x800, scoped, tag = 'input window, operand 1']
    #allocation6 [shape = 's32[2]{0}', space=sflag, size = 0x8, scoped, tag = 'scoped memory for tpu_custom_call.1']
    #allocation7 [shape = 'u8[1024]{0}', space=vmem, size = 0x400, scoped, tag = 'output window, operand 0']
    #allocation8 [shape = 'u8[1024]{0}', space=vmem, size = 0x400, scoped, tag = 'output window, operand 1']
    #allocation9 [shape = 's32[2]{0}', space=sflag, size = 0x8, scoped, tag = 'scoped memory for tpu_custom_call.1']
    %9 = vsyncpa [#allocation3], 0
    %s10 = scalar_lea.sflag [#allocation3], 1
    %11 = vsyncpa %s10, 0
    %12 = vsyncpa [#allocation6], 0
    %s13 = scalar_lea.sflag [#allocation6], 1
    %14 = vsyncpa %s13, 0
    %15 = vsyncpa [#allocation4], 0
    %s16 = scalar_lea.sflag [#allocation4], 1
    %17 = vsyncpa %s16, 0
    %18 = vsyncpa [#allocation9], 0
    %s19 = scalar_lea.sflag [#allocation9], 1
    %20 = vsyncpa %s19, 0
    loop: start=0, step=1, limit=4
    $region2: #{tpu_custom_call.1} parent=1 // loop_pre_header
      _
    $region3: #{tpu_custom_call.1} parent=1 // loop_header
      %s22 = sphi 0, %s26
      %p23 = scmp.ge.s32.totalorder %s22, 4
      %s29 = sphi 0, %s41
      %s30 = sphi 0, %s37
      %s31 = sphi 0, %s29
      %s32 = sphi 0, %s30
      %s33 = sphi 0, %s31
      %s34 = sphi 0, %s32
      %s46 = sphi 0, %s48
      %s49 = sphi 0, %s46
      %s50 = sphi 0, %s49
      %s66 = sphi 0, %s50
      %s74 = sphi 0, %s76
      %s77 = sphi 0, %s74
      %s78 = sphi 0, %s77
      %s94 = sphi 0, %s78
      %s100 = sphi 0, %s102
      %s103 = sphi 0, %s100
      %s104 = sphi 0, %s103
      %s120 = sphi 0, %s104
      %s126 = sphi 0, %s128
      %s129 = sphi 0, %s126
      %s130 = sphi 0, %s129
      %s146 = sphi 0, %s130
    $region4: #{tpu_custom_call.1} parent=1 // loop_header_branch
      %25 = sbr.rel (%p23) target = $region8
    $region5: #{tpu_custom_call.1} parent=1 // loop_body
      %s27 = ssub.s32 %s22, 1
      %s28 = ssub.s32 %s22, 2
      %s35 = sadd.s32 1, %s30
      %p36 = scmp.ge.s32.totalorder %s35, 1
      %s37 = scalar_select %p36, 0, %s35
      %s38 = sadd.s32 1, %s29
      %s39 = scalar_select %p36, %s38, %s29
      %p40 = scmp.ge.s32.totalorder %s39, 2
      %s41 = scalar_select %p40, 0, %s39
      %s42 = ssub.s32 %s29, %s41
      %s43 = ssub.s32 %s30, %s37
      %s44 = sor.u32 %s42, %s43
      %p45 = scmp.eq.s32.totalorder %s44, 0
      %s47 = sadd.s32 %s46, 1
      %s48 = scalar_select %p45, %s46, %s47
      %p51 = pneg %p45
      %p52 = scmp.eq.s32.totalorder %s22, 1
      %p53 = por %p51, %p52
      %p54 = scmp.ne.s32.totalorder %s46, %s49
      %p55 = scmp.eq.s32.totalorder %s22, 0
      %p56 = por %p54, %p55
      %p57 = scmp.ne.s32.totalorder %s46, %s49
      %p58 = scmp.eq.s32.totalorder %s27, 1
      %p59 = por %p57, %p58
      %p60 = scmp.ne.s32.totalorder %s49, %s50
      %p61 = scmp.eq.s32.totalorder %s27, 0
      %p62 = por %p60, %p61
      %p63 = scmp.ne.s32.totalorder %s49, %s50
      %p64 = scmp.eq.s32.totalorder %s28, 1
      %p65 = por %p63, %p64
      %p67 = scmp.ne.s32.totalorder %s50, %s66
      %p68 = scmp.eq.s32.totalorder %s28, 0
      %p69 = por %p67, %p68
      %s70 = ssub.s32 %s29, %s41
      %s71 = ssub.s32 %s30, %s37
      %s72 = sor.u32 %s70, %s71
      %p73 = scmp.eq.s32.totalorder %s72, 0
      %s75 = sadd.s32 %s74, 1
      %s76 = scalar_select %p73, %s74, %s75
      %p79 = pneg %p73
      %p80 = scmp.eq.s32.totalorder %s22, 1
      %p81 = por %p79, %p80
      %p82 = scmp.ne.s32.totalorder %s74, %s77
      %p83 = scmp.eq.s32.totalorder %s22, 0
      %p84 = por %p82, %p83
      %p85 = scmp.ne.s32.totalorder %s74, %s77
      %p86 = scmp.eq.s32.totalorder %s27, 1
      %p87 = por %p85, %p86
      %p88 = scmp.ne.s32.totalorder %s77, %s78
      %p89 = scmp.eq.s32.totalorder %s27, 0
      %p90 = por %p88, %p89
      %p91 = scmp.ne.s32.totalorder %s77, %s78
      %p92 = scmp.eq.s32.totalorder %s28, 1
      %p93 = por %p91, %p92
      %p95 = scmp.ne.s32.totalorder %s78, %s94
      %p96 = scmp.eq.s32.totalorder %s28, 0
      %p97 = por %p95, %p96
      %s98 = ssub.s32 %s29, %s41
      %p99 = scmp.eq.s32.totalorder %s98, 0
      %s101 = sadd.s32 %s100, 1
      %s102 = scalar_select %p99, %s100, %s101
      %p105 = pneg %p99
      %p106 = scmp.eq.s32.totalorder %s22, 1
      %p107 = por %p105, %p106
      %p108 = scmp.ne.s32.totalorder %s100, %s103
      %p109 = scmp.eq.s32.totalorder %s22, 0
      %p110 = por %p108, %p109
      %p111 = scmp.ne.s32.totalorder %s100, %s103
      %p112 = scmp.eq.s32.totalorder %s27, 1
      %p113 = por %p111, %p112
      %p114 = scmp.ne.s32.totalorder %s103, %s104
      %p115 = scmp.eq.s32.totalorder %s27, 0
      %p116 = por %p114, %p115
      %p117 = scmp.ne.s32.totalorder %s103, %s104
      %p118 = scmp.eq.s32.totalorder %s28, 1
      %p119 = por %p117, %p118
      %p121 = scmp.ne.s32.totalorder %s104, %s120
      %p122 = scmp.eq.s32.totalorder %s28, 0
      %p123 = por %p121, %p122
      %s124 = ssub.s32 %s29, %s41
      %p125 = scmp.eq.s32.totalorder %s124, 0
      %s127 = sadd.s32 %s126, 1
      %s128 = scalar_select %p125, %s126, %s127
      %p131 = pneg %p125
      %p132 = scmp.eq.s32.totalorder %s22, 1
      %p133 = por %p131, %p132
      %p134 = scmp.ne.s32.totalorder %s126, %s129
      %p135 = scmp.eq.s32.totalorder %s22, 0
      %p136 = por %p134, %p135
      %p137 = scmp.ne.s32.totalorder %s126, %s129
      %p138 = scmp.eq.s32.totalorder %s27, 1
      %p139 = por %p137, %p138
      %p140 = scmp.ne.s32.totalorder %s129, %s130
      %p141 = scmp.eq.s32.totalorder %s27, 0
      %p142 = por %p140, %p141
      %p143 = scmp.ne.s32.totalorder %s129, %s130
      %p144 = scmp.eq.s32.totalorder %s28, 1
      %p145 = por %p143, %p144
      %p147 = scmp.ne.s32.totalorder %s130, %s146
      %p148 = scmp.eq.s32.totalorder %s28, 0
      %p149 = por %p147, %p148
      %p150 = scmp.le.s32.totalorder 1, %s22
      %p151 = scmp.lt.s32.totalorder %s22, 3
      %p152 = pnand %p150, %p151
      %p153 = pneg %p152
      // Predicated region
      $region9: #{tpu_custom_call.1} parent=5 // pred_check
        _
      $region10: #{tpu_custom_call.1} parent=5 // pred_check_branch
        %155 = sbr.rel (%p152) target = $region12
      $region11: #{tpu_custom_call.1} parent=5 // pred_region
        %s156 = ssub.s32 %s22, 1
      $region12: #{tpu_custom_call.1} parent=5 // pred_fallthru
        _
      %p157 = scmp.lt.s32.totalorder %s22, 2
      // Predicated region
      $region13: #{tpu_custom_call.1} parent=5 // pred_check
        %p158 = pneg %p157
      $region14: #{tpu_custom_call.1} parent=5 // pred_check_branch
        %160 = sbr.rel (%p158) target = $region16
      $region15: #{tpu_custom_call.1} parent=5 // pred_region
        // Predicated region
        $region17: #{tpu_custom_call.1} parent=15 // pred_check
          %p161 = pneg %p56
        $region18: #{tpu_custom_call.1} parent=15 // pred_check_branch
          %163 = sbr.rel (%p161) target = $region20
        $region19: #{tpu_custom_call.1} parent=15 // pred_region
          %s164 = sand.u32 %s46, 1
          %s165 = scalar_lea.sflag [#allocation3], %s164
          %s166 = sand.u32 %s46, 1
          %s167 = smul.addr %s166, 8
          %s168 = scalar_lea.vmem [#allocation2], %s167
          %s169 = smul.u32 2, %s30
          %s171 = ssub.s32 128, 128
          %172 = vsyncadd %s165, %s171
          %s173 = smul.addr %s29, 2
          %s174 = sadd.s32 %s169, %s173
          %s175 = smul.addr %s174, 64
          %s176 = scalar_lea.hbm %s0, %s175
          %s178 = sshll.u32 %s168, 4
          %s179 = int_to_ptr.vmem [resolvable:$true] %s178
          %181 = dma.hbm_to_vmem [thread:$0]  %s176, 128, %s179, %s165
        $region20: #{tpu_custom_call.1} parent=15 // pred_fallthru
          _
        // Predicated region
        $region21: #{tpu_custom_call.1} parent=15 // pred_check
          %p182 = pneg %p84
        $region22: #{tpu_custom_call.1} parent=15 // pred_check_branch
          %184 = sbr.rel (%p182) target = $region24
        $region23: #{tpu_custom_call.1} parent=15 // pred_region
          %s185 = sand.u32 %s74, 1
          %s186 = scalar_lea.sflag [#allocation6], %s185
          %s187 = sand.u32 %s74, 1
          %s188 = smul.addr %s187, 2
          %s189 = scalar_lea.vmem [#allocation5], %s188
          %s190 = smul.u32 2, %s30
          %s192 = ssub.s32 32, 32
          %193 = vsyncadd %s186, %s192
          %s194 = smul.addr %s29, 2
          %s195 = sadd.s32 %s190, %s194
          %s196 = smul.addr %s195, 16
          %s197 = scalar_lea.hbm %s1, %s196
          %s199 = sshll.u32 %s189, 4
          %s200 = int_to_ptr.vmem [resolvable:$true] %s199
          %202 = dma.hbm_to_vmem [thread:$0]  %s197, 32, %s200, %s186
        $region24: #{tpu_custom_call.1} parent=15 // pred_fallthru
          _
      $region16: #{tpu_custom_call.1} parent=5 // pred_fallthru
        _
      %p203 = scmp.le.s32.totalorder 1, %s22
      %p204 = scmp.lt.s32.totalorder %s22, 3
      %p205 = pnand %p203, %p204
      %p206 = pneg %p205
      // Predicated region
      $region25: #{tpu_custom_call.1} parent=5 // pred_check
        _
      $region26: #{tpu_custom_call.1} parent=5 // pred_check_branch
        %208 = sbr.rel (%p205) target = $region28
      $region27: #{tpu_custom_call.1} parent=5 // pred_region
        %s209 = ssub.s32 %s22, 1
        %s210 = sand.u32 %s49, 1
        %s211 = scalar_lea.sflag [#allocation3], %s210
        %s212 = sand.u32 %s49, 1
        %s213 = smul.addr %s212, 8
        %s214 = scalar_lea.vmem [#allocation2], %s213
        // Predicated region
        $region29: #{tpu_custom_call.1} parent=27 // pred_check
          %p215 = pneg %p62
        $region30: #{tpu_custom_call.1} parent=27 // pred_check_branch
          %217 = sbr.rel (%p215) target = $region32
        $region31: #{tpu_custom_call.1} parent=27 // pred_region
          %218 = dma.done %s211, 128
        $region32: #{tpu_custom_call.1} parent=27 // pred_fallthru
          _
        %s219 = sand.u32 %s77, 1
        %s220 = scalar_lea.sflag [#allocation6], %s219
        %s221 = sand.u32 %s77, 1
        %s222 = smul.addr %s221, 2
        %s223 = scalar_lea.vmem [#allocation5], %s222
        // Predicated region
        $region33: #{tpu_custom_call.1} parent=27 // pred_check
          %p224 = pneg %p90
        $region34: #{tpu_custom_call.1} parent=27 // pred_check_branch
          %226 = sbr.rel (%p224) target = $region36
        $region35: #{tpu_custom_call.1} parent=27 // pred_region
          %227 = dma.done %s220, 32
        $region36: #{tpu_custom_call.1} parent=27 // pred_fallthru
          _
        %s228 = sand.u32 %s49, 1
        %s229 = scalar_lea.sflag [#allocation3], %s228
        %s230 = sand.u32 %s49, 1
        %s231 = smul.addr %s230, 8
        %s232 = scalar_lea.vmem [#allocation2], %s231
        %p233 = pneg %p62
        %p234 = pneg %p59
        %s235 = sand.u32 %s77, 1
        %s236 = scalar_lea.sflag [#allocation6], %s235
        %s237 = sand.u32 %s77, 1
        %s238 = smul.addr %s237, 2
        %s239 = scalar_lea.vmem [#allocation5], %s238
        %p240 = pneg %p90
        %p241 = pneg %p87
        %p242 = pneg %p116
        %p243 = pneg %p113
        %s244 = sand.u32 %s103, 1
        %s245 = scalar_lea.sflag [#allocation4], %s244
        %s246 = sand.u32 %s103, 1
        %s247 = scalar_lea.vmem [#allocation7], %s246
        %p248 = pneg %p142
        %p249 = pneg %p139
        %s250 = sand.u32 %s129, 1
        %s251 = scalar_lea.sflag [#allocation9], %s250
        %s252 = sand.u32 %s129, 1
        %s253 = scalar_lea.vmem [#allocation8], %s252
        %s254 = smul.u32 2, %s32
        %s255 = smul.u32 2, %s32
        %p256 = scmp.eq.s32.totalorder %s32, 0
        // Predicated region
        $region37: #{tpu_custom_call.1} parent=27 // pred_check
          %p257 = pneg %p256
        $region38: #{tpu_custom_call.1} parent=27 // pred_check_branch
          %259 = sbr.rel (%p257) target = $region40
        $region39: #{tpu_custom_call.1} parent=27 // pred_region
          %vm260 = vcmask 24576
          %261 = vst.msk [vmem:[%s247] sm:$0x1] %vm260, 0.0
          %262 = vst.msk [vmem:[%s253] sm:$0x1] %vm260, 0.0
        $region40: #{tpu_custom_call.1} parent=27 // pred_fallthru
          _
        %v263 = vld [vmem:[%s214] sm:$0xff]
        %v264 = vld [vmem:[%s223] sm:$0x3]
        %v266 = vcombine.high %v263, %v263
        %vm268 = vcmask 1043456
        %v269 = vsel %vm268, %v263, -inf
        %v270 = vrot.slane %v269, 4
        %v271 = vmax.f32 %v269, %v270
        %v272 = vrot.slane %v271, 2
        %v273 = vmax.f32 %v271, %v272
        %v274 = vrot.slane %v273, 1
        %v275 = vmax.f32 %v273, %v274
        %v276 = vsel %vm268, %v266, -inf
        %v277 = vrot.slane %v276, 4
        %v278 = vmax.f32 %v276, %v277
        %v279 = vrot.slane %v278, 2
        %v280 = vmax.f32 %v278, %v279
        %v281 = vrot.slane %v280, 1
        %v282 = vmax.f32 %v280, %v281
        %v285 = vcombine.low %v275, %v282
        %v287 = vsub.f32 %v263, %v285
        %v288 = vmul.f32 %v287, 1.442695
        %v289 = vpow.pop %v288
        %v291 = vcombine.high %v289, %v289
        %v293 = vsel %vm268, %v289, 0.0
        %v294 = vrot.slane %v293, 4
        %v295 = vadd.f32 %v293, %v294
        %v296 = vrot.slane %v295, 2
        %v297 = vadd.f32 %v295, %v296
        %v298 = vrot.slane %v297, 1
        %v299 = vadd.f32 %v297, %v298
        %v300 = vsel %vm268, %v291, 0.0
        %v301 = vrot.slane %v300, 4
        %v302 = vadd.f32 %v300, %v301
        %v303 = vrot.slane %v302, 2
        %v304 = vadd.f32 %v302, %v303
        %v305 = vrot.slane %v304, 1
        %v306 = vadd.f32 %v304, %v305
        %v307 = vrcp.pop %v299
        %v308 = vmul.f32 1.0, %v307
        %v309 = vrcp.pop %v306
        %v310 = vmul.f32 1.0, %v309
        %v313 = vcombine.low %v308, %v310
        %v315 = vmul.f32 %v289, %v313
        %v316 = vlaneseq
        %v317 = vshrl.u32 %v316, 7
        %v318 = vlaneseq
        %v319 = vshrl.u32 %v318, 7
        %v320 = vsub.s32 0, %v319
        %v321 = vrot.slane %v264, %v320
        %v322 = vlaneseq
        %v323 = vshrl.u32 %v322, 7
        %v324 = vsub.s32 1, %v323
        %v325 = vrot.slane %v264, %v324
        %vm326 = vcmp.eq.s32.totalorder %v321, %v317
        %vm327 = vcmp.eq.s32.totalorder %v325, %v317
        %v328 = vsel %vm326, 1, 0
        %v329 = vsel %vm327, 1, 0
        %v330 = vcvt.s32.f32 %v328
        %v331 = vcvt.s32.f32 %v329
        %v334 = vcombine.low %v330, %v331
        %v336 = vmul.f32 %v315, %v334
        %v338 = vcombine.high %v336, %v336
        %v340 = vsel %vm268, %v336, 0.0
        %v341 = vsel %vm268, %v338, 0.0
        %v342 = vadd.f32 %v340, %v341
        %343 = vadd.xlane.f32.xlu0 %v342
        %v344 = vpop.xlane.xlu0 %343
        %v345 = vadd.f32 %v315, %v334
        %v347 = vcombine.high %v345, %v345
        %v349 = vsel %vm268, %v345, 0.0
        %v350 = vsel %vm268, %v347, 0.0
        %v351 = vadd.f32 %v349, %v350
        %352 = vadd.xlane.f32.xlu0 %v351
        %v353 = vpop.xlane.xlu0 %352
        %v354 = vld [vmem:[%s247] sm:$0x1]
        %v356 = vlaneseq
        %v357 = vshrl.u32 %v356, 7
        %v358 = vsub.s32 0, %v357
        %v359 = vrot.slane %v344, %v358
        %v360 = vlaneseq
        %v361 = vshrl.u32 %v360, 7
        %v362 = vsub.s32 1, %v361
        %v363 = vrot.slane %v344, %v362
        %v364 = vlaneseq
        %v365 = vshrl.u32 %v364, 7
        %v366 = vsub.s32 2, %v365
        %v367 = vrot.slane %v344, %v366
        %v368 = vlaneseq
        %v369 = vshrl.u32 %v368, 7
        %v370 = vsub.s32 3, %v369
        %v371 = vrot.slane %v344, %v370
        %v372 = vcombine.low %v359, %v363
        %v373 = vcombine.low %v367, %v371
        %v375 = vunpack.c.l.s4 1966171168
        %v376 = vunpack.c.0.s8 %v375
        %v377 = vlaneseq
        %v378 = vshrl.u32 %v377, 7
        %v379 = vsub.s32 %v376, %v378
        %v380 = vrot.slane %v372, %v379
        %v382 = vunpack.c.l.s4 1966171168
        %v383 = vunpack.c.0.s8 %v382
        %v384 = vlaneseq
        %v385 = vshrl.u32 %v384, 7
        %v386 = vsub.s32 %v383, %v385
        %v387 = vrot.slane %v373, %v386
        %v388 = vcombine.low %v380, %v387
        %v390 = vunpack.c.l.s4 1966171168
        %v391 = vunpack.c.0.s8 %v390
        %v392 = vlaneseq
        %v393 = vshrl.u32 %v392, 7
        %v394 = vsub.s32 %v391, %v393
        %v395 = vrot.slane %v388, %v394
        %396 = vset.pattern.permute.xlu0 0
        %397 = vperm.xlu0 %396, %v395
        %v398 = vpop.permute.xlu0 %397
        %v399 = vlaneseq
        %v400 = vand.u32 %v399, 127
        %v401 = vlaneseq
        %v402 = vshrl.u32 %v401, 7
        %v403 = vsub.s32 %v400, %v402
        %v404 = vrot.slane %v398, %v403
        %v406 = vunpack.c.l.s4 1966171168
        %v407 = vunpack.c.0.s8 %v406
        %v408 = vlaneseq
        %v409 = vshrl.u32 %v408, 7
        %v410 = vsub.s32 %v407, %v409
        %v411 = vrot.slane %v404, %v410
        %v413 = vunpack.c.l.s4 1966171168
        %v414 = vunpack.c.0.s8 %v413
        %v415 = vlaneseq
        %v416 = vshrl.u32 %v415, 7
        %v417 = vsub.s32 %v414, %v416
        %v418 = vrot.slane %v411, %v417
        %v420 = vadd.f32 %v354, %v418
        %vm421 = vcmask 24576
        %422 = vst.msk [vmem:[%s247] sm:$0x1] %vm421, %v420
        %v423 = vld [vmem:[%s253] sm:$0x1]
        %v425 = vlaneseq
        %v426 = vshrl.u32 %v425, 7
        %v427 = vsub.s32 0, %v426
        %v428 = vrot.slane %v353, %v427
        %v429 = vlaneseq
        %v430 = vshrl.u32 %v429, 7
        %v431 = vsub.s32 1, %v430
        %v432 = vrot.slane %v353, %v431
        %v433 = vlaneseq
        %v434 = vshrl.u32 %v433, 7
        %v435 = vsub.s32 2, %v434
        %v436 = vrot.slane %v353, %v435
        %v437 = vlaneseq
        %v438 = vshrl.u32 %v437, 7
        %v439 = vsub.s32 3, %v438
        %v440 = vrot.slane %v353, %v439
        %v441 = vcombine.low %v428, %v432
        %v442 = vcombine.low %v436, %v440
        %v444 = vunpack.c.l.s4 1966171168
        %v445 = vunpack.c.0.s8 %v444
        %v446 = vlaneseq
        %v447 = vshrl.u32 %v446, 7
        %v448 = vsub.s32 %v445, %v447
        %v449 = vrot.slane %v441, %v448
        %v451 = vunpack.c.l.s4 1966171168
        %v452 = vunpack.c.0.s8 %v451
        %v453 = vlaneseq
        %v454 = vshrl.u32 %v453, 7
        %v455 = vsub.s32 %v452, %v454
        %v456 = vrot.slane %v442, %v455
        %v457 = vcombine.low %v449, %v456
        %v459 = vunpack.c.l.s4 1966171168
        %v460 = vunpack.c.0.s8 %v459
        %v461 = vlaneseq
        %v462 = vshrl.u32 %v461, 7
        %v463 = vsub.s32 %v460, %v462
        %v464 = vrot.slane %v457, %v463
        %465 = vset.pattern.permute.xlu0 0
        %466 = vperm.xlu0 %465, %v464
        %v467 = vpop.permute.xlu0 %466
        %v468 = vlaneseq
        %v469 = vshrl.u32 %v468, 7
        %v470 = vsub.s32 %v400, %v469
        %v471 = vrot.slane %v467, %v470
        %v473 = vunpack.c.l.s4 1966171168
        %v474 = vunpack.c.0.s8 %v473
        %v475 = vlaneseq
        %v476 = vshrl.u32 %v475, 7
        %v477 = vsub.s32 %v474, %v476
        %v478 = vrot.slane %v471, %v477
        %v480 = vunpack.c.l.s4 1966171168
        %v481 = vunpack.c.0.s8 %v480
        %v482 = vlaneseq
        %v483 = vshrl.u32 %v482, 7
        %v484 = vsub.s32 %v481, %v483
        %v485 = vrot.slane %v478, %v484
        %v487 = vadd.f32 %v423, %v485
        %488 = vst.msk [vmem:[%s253] sm:$0x1] %vm421, %v487
        %s489 = sand.u32 %s103, 1
        %s490 = scalar_lea.sflag [#allocation4], %s489
        %s491 = sand.u32 %s103, 1
        %s492 = scalar_lea.vmem [#allocation7], %s491
        %s493 = sand.u32 %s129, 1
        %s494 = scalar_lea.sflag [#allocation9], %s493
        %s495 = sand.u32 %s129, 1
        %s496 = scalar_lea.vmem [#allocation8], %s495
        // Predicated region
        $region41: #{tpu_custom_call.1} parent=27 // pred_check
          %p497 = pneg %p113
        $region42: #{tpu_custom_call.1} parent=27 // pred_check_branch
          %499 = sbr.rel (%p497) target = $region44
        $region43: #{tpu_custom_call.1} parent=27 // pred_region
          %s501 = ssub.s32 16, 16
          %502 = vsyncadd %s490, %s501
          %s503 = smul.addr %s31, 16
          %s504 = scalar_lea.hbm %s2, %s503
          %s506 = sshll.u32 %s492, 4
          %s507 = int_to_ptr.vmem [resolvable:$true] %s506
          %509 = dma.vmem_to_hbm [thread:$0]  %s507, 16, %s504, %s490
        $region44: #{tpu_custom_call.1} parent=27 // pred_fallthru
          _
        // Predicated region
        $region45: #{tpu_custom_call.1} parent=27 // pred_check
          %p510 = pneg %p139
        $region46: #{tpu_custom_call.1} parent=27 // pred_check_branch
          %512 = sbr.rel (%p510) target = $region48
        $region47: #{tpu_custom_call.1} parent=27 // pred_region
          %s514 = ssub.s32 16, 16
          %515 = vsyncadd %s494, %s514
          %s516 = smul.addr %s31, 16
          %s517 = scalar_lea.hbm %s3, %s516
          %s519 = sshll.u32 %s496, 4
          %s520 = int_to_ptr.vmem [resolvable:$true] %s519
          %522 = dma.vmem_to_hbm [thread:$0]  %s520, 16, %s517, %s494
        $region48: #{tpu_custom_call.1} parent=27 // pred_fallthru
          _
      $region28: #{tpu_custom_call.1} parent=5 // pred_fallthru
        _
      %p523 = scmp.le.s32.totalorder 2, %s22
      // Predicated region
      $region49: #{tpu_custom_call.1} parent=5 // pred_check
        %p524 = pneg %p523
      $region50: #{tpu_custom_call.1} parent=5 // pred_check_branch
        %526 = sbr.rel (%p524) target = $region52
      $region51: #{tpu_custom_call.1} parent=5 // pred_region
        %s527 = ssub.s32 %s22, 2
        // Predicated region
        $region53: #{tpu_custom_call.1} parent=51 // pred_check
          %p528 = pneg %p119
        $region54: #{tpu_custom_call.1} parent=51 // pred_check_branch
          %530 = sbr.rel (%p528) target = $region56
        $region55: #{tpu_custom_call.1} parent=51 // pred_region
          %s531 = sand.u32 %s104, 1
          %s532 = scalar_lea.sflag [#allocation4], %s531
          %s533 = sand.u32 %s104, 1
          %s534 = scalar_lea.vmem [#allocation7], %s533
          %535 = dma.done %s532, 16
        $region56: #{tpu_custom_call.1} parent=51 // pred_fallthru
          _
        // Predicated region
        $region57: #{tpu_custom_call.1} parent=51 // pred_check
          %p536 = pneg %p145
        $region58: #{tpu_custom_call.1} parent=51 // pred_check_branch
          %538 = sbr.rel (%p536) target = $region60
        $region59: #{tpu_custom_call.1} parent=51 // pred_region
          %s539 = sand.u32 %s130, 1
          %s540 = scalar_lea.sflag [#allocation9], %s539
          %s541 = sand.u32 %s130, 1
          %s542 = scalar_lea.vmem [#allocation8], %s541
          %543 = dma.done %s540, 16
        $region60: #{tpu_custom_call.1} parent=51 // pred_fallthru
          _
      $region52: #{tpu_custom_call.1} parent=5 // pred_fallthru
        _
    $region6: #{tpu_custom_call.1} parent=1 // loop_footer
      %s26 = sadd.s32 1, %s22
    $region7: #{tpu_custom_call.1} parent=1 // loop_footer_branch
      %21 = sbr.rel target = $region3
    $region8: #{tpu_custom_call.1} parent=1 // loop_exit
      _
    %544 = vsyncpa [#allocation3], 1
    %s545 = scalar_lea.sflag [#allocation3], 1
    %546 = vsyncpa %s545, 1
    %547 = vsyncpa [#allocation6], 1
    %s548 = scalar_lea.sflag [#allocation6], 1
    %549 = vsyncpa %s548, 1
    %550 = vsyncpa [#allocation4], 1
    %s551 = scalar_lea.sflag [#allocation4], 1
    %552 = vsyncpa %s551, 1
    %553 = vsyncpa [#allocation9], 1
    %s554 = scalar_lea.sflag [#allocation9], 1
    %555 = vsyncpa %s554, 1

</llo_original>
